<compile_context>
chip_gen: v7x
topology: tpu7x:2x2x1
jax: 0.10.0
libtpu: 0.0.40
codegen_flags: <defaults>
</compile_context>

<pallas_src>
import jax
import jax.numpy as jnp
from jax.experimental import pallas as pl
from jax.experimental.pallas import tpu as pltpu


def _fused_gcn_kernel(a_ref, x_ref, w1_ref, b1_ref, w2_ref, b2_ref, o_ref):
    """out = A_hat @ relu(A_hat @ X @ W1 + b1) @ W2 + b2, all blocks in VMEM."""
    a = a_ref[...]                                                   # [N_p, N_p] bf16

    # ----- layer 1: aggregate first (narrow f_in), then project to hid -----
    ax = jnp.dot(a, x_ref[...], preferred_element_type=jnp.float32)            # [N_p, in_p]  f32
    h = jnp.dot(ax.astype(jnp.bfloat16), w1_ref[...],
                preferred_element_type=jnp.float32)                             # [N_p, hid_p] f32
    h = jnp.maximum(h + b1_ref[...], 0.0)                            # bias + relu in f32 (VPU)

    # TODO(synk): nn.Dropout(0.5) between the layers is stochastic in training
    # mode; eval-mode (identity) semantics are used here.

    # ----- layer 2: project first (narrow f_out), then aggregate -----------
    hw = jnp.dot(h.astype(jnp.bfloat16), w2_ref[...],
                 preferred_element_type=jnp.float32)                            # [N_p, out_p] f32
    # TODO(synk): if accuracy vs a pure-f32 GraphConv matters at large N, keep
    # A in f32 for this final aggregation (bf16 D^{-1/2} loses mantissa).
    out = jnp.dot(a, hw.astype(jnp.bfloat16),
                  preferred_element_type=jnp.float32)                           # [N_p, out_p] f32
    o_ref[...] = (out + b2_ref[...]).astype(o_ref.dtype)             # lane-dense f32 store


def _round_up(x, m):
    return (x + m - 1) // m * m


def _pad2d(a, shape):
    return jnp.pad(a, [(0, s - d) for s, d in zip(shape, a.shape)])


def prepare_gcn_operands(a_hat, feat, params):
    """One-time prep: pad + cast per-graph / per-model constants.

    Returns (operands, meta). `operands` are device-resident padded bf16/f32
    arrays fed straight into the jitted forward; no pads/casts happen per call.
    """
    w1, b1, w2, b2 = params
    n = a_hat.shape[0]
    in_size = feat.shape[1]
    hid = w1.shape[1]
    out_size = w2.shape[1]

    n_p = _round_up(n, 16)             # bf16 sublane tile
    in_p = _round_up(in_size, 128)     # lane tile
    hid_p = _round_up(hid, 128)
    out_p = _round_up(out_size, 128)   # lane-dense output store (no masked vst)

    a_bf = _pad2d(a_hat, (n_p, n_p)).astype(jnp.bfloat16)
    x_bf = _pad2d(feat, (n_p, in_p)).astype(jnp.bfloat16)
    w1_p = _pad2d(w1, (in_p, hid_p)).astype(jnp.bfloat16)
    b1_p = _pad2d(b1.reshape(1, hid), (1, hid_p)).astype(jnp.float32)
    w2_p = _pad2d(w2, (hid_p, out_p)).astype(jnp.bfloat16)
    b2_p = _pad2d(b2.reshape(1, out_size), (1, out_p)).astype(jnp.float32)

    operands = tuple(jax.device_put(o) for o in (a_bf, x_bf, w1_p, b1_p, w2_p, b2_p))
    meta = {"n": n, "out_size": out_size, "n_p": n_p, "out_p": out_p}
    return operands, meta


@jax.jit
def gcn_forward_padded(a_bf, x_bf, w1_p, b1_p, w2_p, b2_p):
    """Fused 2-layer GCN forward. Returns the padded [N_p, out_p] f32 buffer
    (slice [:n, :out_size] only if the logical shape is needed downstream)."""
    n_p = a_bf.shape[0]
    out_p = w2_p.shape[1]
    return pl.pallas_call(
        _fused_gcn_kernel,
        out_shape=jax.ShapeDtypeStruct((n_p, out_p), jnp.float32),
        in_specs=[pl.BlockSpec(memory_space=pltpu.MemorySpace.VMEM)] * 6,
        out_specs=pl.BlockSpec(memory_space=pltpu.MemorySpace.VMEM),
        compiler_params=pltpu.CompilerParams(vmem_limit_bytes=32 * 1024 * 1024),
    )(a_bf, x_bf, w1_p, b1_p, w2_p, b2_p)


def normalized_adjacency(edges_src, edges_dst, num_nodes, dtype=jnp.float32):
    """Dense A_hat = D^{-1/2} (A + I) D^{-1/2} (dgl.add_self_loop + norm='both').

    Note: duplicate directed edges collapse to weight 1 (simple-graph
    assumption), matching the example graph used below.
    """
    adj = jnp.zeros((num_nodes, num_nodes), dtype=dtype)
    adj = adj.at[edges_dst, edges_src].set(1.0)
    adj = adj + jnp.eye(num_nodes, dtype=dtype)      # add_self_loop
    deg = jnp.sum(adj, axis=1)
    d_inv_sqrt = jnp.where(deg > 0, 1.0 / jnp.sqrt(deg), 0.0)
    return (d_inv_sqrt[:, None] * adj) * d_inv_sqrt[None, :]


if __name__ == "__main__":
    # Small, deterministic problem: 8 nodes, in=16, hid=32, out=8.
    num_nodes, in_size, hid_size, out_size = 8, 16, 32, 8

    key = jax.random.PRNGKey(0)
    k_feat, k_w1, k_w2 = jax.random.split(key, 3)

    # Node features [N, F_in].
    feat = jax.random.normal(k_feat, (num_nodes, in_size), dtype=jnp.float32)

    # A small fixed undirected graph (ring + one chord), directed edges both ways.
    src = jnp.array([0, 1, 1, 2, 2, 3, 3, 4, 4, 5, 5, 6, 6, 7, 7, 0, 0, 4],
                    dtype=jnp.int32)
    dst = jnp.array([1, 0, 2, 1, 3, 2, 4, 3, 5, 4, 6, 5, 7, 6, 0, 7, 4, 0],
                    dtype=jnp.int32)
    a_hat = normalized_adjacency(src, dst, num_nodes)

    # Deterministic Xavier-ish parameter init (GraphConv weight [F_in, F_out],
    # bias [F_out] initialized to zero as in DGL).
    w1 = jax.random.normal(k_w1, (in_size, hid_size), dtype=jnp.float32)
    w1 = w1 * jnp.sqrt(2.0 / (in_size + hid_size))
    b1 = jnp.zeros((hid_size,), dtype=jnp.float32)
    w2 = jax.random.normal(k_w2, (hid_size, out_size), dtype=jnp.float32)
    w2 = w2 * jnp.sqrt(2.0 / (hid_size + out_size))
    b2 = jnp.zeros((out_size,), dtype=jnp.float32)

    # One-time operand prep (per-graph / per-model constants), then the jitted
    # forward is just the single fused pallas_call.
    operands, meta = prepare_gcn_operands(a_hat, feat, (w1, b1, w2, b2))
    out_padded = gcn_forward_padded(*operands)
    out_padded = jax.block_until_ready(out_padded)

    # Logical-shape view for verification only (consumers can keep the padded
    # buffer — padded rows/lanes carry no real-node information).
    out = out_padded[:num_nodes, :out_size]

    # Pure-JAX reference, mirroring the kernel's bf16-operand / f32-accumulate
    # casts so the comparison is tight.
    bf, f32 = jnp.bfloat16, jnp.float32
    a_r = a_hat.astype(bf).astype(f32)
    x_r = feat.astype(bf).astype(f32)
    w1_r = w1.astype(bf).astype(f32)
    w2_r = w2.astype(bf).astype(f32)
    ax_r = a_r @ x_r
    h_ref = jnp.maximum(ax_r.astype(bf).astype(f32) @ w1_r + b1, 0.0)
    hw_r = h_ref.astype(bf).astype(f32) @ w2_r
    ref = a_r @ hw_r.astype(bf).astype(f32) + b2

    assert out_padded.shape == (meta["n_p"], meta["out_p"])
    assert out.shape == (num_nodes, out_size)
    assert jnp.allclose(out, ref, atol=1e-2, rtol=1e-2), (
        f"max abs err = {jnp.max(jnp.abs(out - ref))}")

    print("KERNEL_OK")
</pallas_src>

<mosaic_0001>
module attributes {stable_mosaic.version = 11 : i64} {
  func.func @_fused_gcn_kernel(%arg0: memref<16x16xbf16, #tpu.memory_space<vmem>>, %arg1: memref<16x128xbf16, #tpu.memory_space<vmem>>, %arg2: memref<128x128xbf16, #tpu.memory_space<vmem>>, %arg3: memref<1x128xf32, #tpu.memory_space<vmem>>, %arg4: memref<128x128xbf16, #tpu.memory_space<vmem>>, %arg5: memref<1x128xf32, #tpu.memory_space<vmem>>, %arg6: memref<16x128xf32, #tpu.memory_space<vmem>>) attributes {dimension_semantics = [], scalar_prefetch = 0 : i64, scratch_operands = 0 : i64, tpu.core_type = #tpu.core_type<tc>} {
    %c0 = arith.constant 0 : index
    %c0_0 = arith.constant 0 : index
    %0 = vector.load %arg0[%c0, %c0_0] : memref<16x16xbf16, #tpu.memory_space<vmem>>, vector<16x16xbf16>
    %c0_1 = arith.constant 0 : index
    %c0_2 = arith.constant 0 : index
    %1 = vector.load %arg1[%c0_1, %c0_2] : memref<16x128xbf16, #tpu.memory_space<vmem>>, vector<16x128xbf16>
    %cst = arith.constant dense<0.000000e+00> : vector<16x128xf32>
    %2 = tpu.matmul %0, %1, %cst {dimension_numbers = #tpu.dot_dimension_numbers<[1], [0], [0], [1], [0, 0, 1, 1], [], []>} : vector<16x16xbf16>, vector<16x128xbf16>, vector<16x128xf32> -> vector<16x128xf32>
    %3 = arith.truncf %2 : vector<16x128xf32> to vector<16x128xbf16>
    %c0_3 = arith.constant 0 : index
    %c0_4 = arith.constant 0 : index
    %4 = vector.load %arg2[%c0_3, %c0_4] : memref<128x128xbf16, #tpu.memory_space<vmem>>, vector<128x128xbf16>
    %cst_5 = arith.constant dense<0.000000e+00> : vector<16x128xf32>
    %5 = tpu.matmul %3, %4, %cst_5 {dimension_numbers = #tpu.dot_dimension_numbers<[1], [0], [0], [1], [0, 0, 1, 1], [], []>} : vector<16x128xbf16>, vector<128x128xbf16>, vector<16x128xf32> -> vector<16x128xf32>
    %c0_6 = arith.constant 0 : index
    %c0_7 = arith.constant 0 : index
    %6 = vector.load %arg3[%c0_6, %c0_7] : memref<1x128xf32, #tpu.memory_space<vmem>>, vector<1x128xf32>
    %7 = vector.broadcast %6 : vector<1x128xf32> to vector<16x128xf32>
    %8 = arith.addf %5, %7 : vector<16x128xf32>
    %cst_8 = arith.constant 0.000000e+00 : f32
    %9 = vector.broadcast %cst_8 : f32 to vector<16x128xf32>
    %10 = arith.maximumf %8, %9 : vector<16x128xf32>
    %11 = arith.truncf %10 : vector<16x128xf32> to vector<16x128xbf16>
    %c0_9 = arith.constant 0 : index
    %c0_10 = arith.constant 0 : index
    %12 = vector.load %arg4[%c0_9, %c0_10] : memref<128x128xbf16, #tpu.memory_space<vmem>>, vector<128x128xbf16>
    %cst_11 = arith.constant dense<0.000000e+00> : vector<16x128xf32>
    %13 = tpu.matmul %11, %12, %cst_11 {dimension_numbers = #tpu.dot_dimension_numbers<[1], [0], [0], [1], [0, 0, 1, 1], [], []>} : vector<16x128xbf16>, vector<128x128xbf16>, vector<16x128xf32> -> vector<16x128xf32>
    %14 = arith.truncf %13 : vector<16x128xf32> to vector<16x128xbf16>
    %cst_12 = arith.constant dense<0.000000e+00> : vector<16x128xf32>
    %15 = tpu.matmul %0, %14, %cst_12 {dimension_numbers = #tpu.dot_dimension_numbers<[1], [0], [0], [1], [0, 0, 1, 1], [], []>} : vector<16x16xbf16>, vector<16x128xbf16>, vector<16x128xf32> -> vector<16x128xf32>
    %c0_13 = arith.constant 0 : index
    %c0_14 = arith.constant 0 : index
    %16 = vector.load %arg5[%c0_13, %c0_14] : memref<1x128xf32, #tpu.memory_space<vmem>>, vector<1x128xf32>
    %17 = vector.broadcast %16 : vector<1x128xf32> to vector<16x128xf32>
    %18 = arith.addf %15, %17 : vector<16x128xf32>
    %c0_15 = arith.constant 0 : index
    %c0_16 = arith.constant 0 : index
    %19 = vector.load %arg6[%c0_15, %c0_16] : memref<16x128xf32, #tpu.memory_space<vmem>>, vector<16x128xf32>
    tpu.vector_store %arg6[%c0_15, %c0_16], %18 {strides = array<i32>} : memref<16x128xf32, #tpu.memory_space<vmem>>, vector<16x128xf32>,
    return
  }
}

</mosaic_0001>

<llo_original>
// kernel: gcn_forward_padded.1
$region0: #{gcn_forward_padded.1}
  #allocation0 [shape = 'u32[]', space=smem, size = 0x4, offset = 0x4, fixed_abs, tag = 'smem constant byte address 0x4 - core index']
  #allocation1 [shape = 'u32[144,128]{1,0:T(1,128)}', space=vmem, size = 0x12000, scoped, tag = 'internal scratch']
  %s0 = inlined_call_operand.hbm [shape: bf16[16,16], index: 0, kind: input, shape index: {}]
  %s1 = inlined_call_operand.hbm [shape: bf16[16,128], index: 1, kind: input, shape index: {}]
  %s2 = inlined_call_operand.hbm [shape: bf16[128,128], index: 2, kind: input, shape index: {}]
  %s3 = inlined_call_operand.vmem [shape: f32[1,128], index: 3, kind: input, shape index: {}]
  %s4 = inlined_call_operand.hbm [shape: bf16[128,128], index: 4, kind: input, shape index: {}]
  %s5 = inlined_call_operand.vmem [shape: f32[1,128], index: 5, kind: input, shape index: {}]
  %s6 = inlined_call_operand.hbm [shape: f32[16,128], index: 6, kind: output, shape index: {}]
  %s7 = sld [smem:[#allocation0]]
  $region50: #{gcn_forward_padded.1} parent=0
    _
  %s9 = ssub.s32 1, %s7
  %s10 = scalar_select 0, %s9, %s7
  $region1: #{gcn_forward_padded.1} parent=0
    #allocation2 [shape = 'u8[4096]{0}', space=vmem, size = 0x1000, scoped, tag = 'input window, operand 0, single buffered']
    #allocation3 [shape = 's32[1]{0}', space=sflag, size = 0x4, scoped, tag = 'scoped memory for gcn_forward_padded.1']
    #allocation4 [shape = 's32[1]{0}', space=sflag, size = 0x4, scoped, tag = 'scoped memory for gcn_forward_padded.1']
    #allocation5 [shape = 'u8[4096]{0}', space=vmem, size = 0x1000, scoped, tag = 'input window, operand 1, single buffered']
    #allocation6 [shape = 's32[1]{0}', space=sflag, size = 0x4, scoped, tag = 'scoped memory for gcn_forward_padded.1']
    #allocation7 [shape = 'u8[32768]{0}', space=vmem, size = 0x8000, scoped, tag = 'input window, operand 2, single buffered']
    #allocation8 [shape = 'u8[32768]{0}', space=vmem, size = 0x8000, scoped, tag = 'input window, operand 4, single buffered']
    #allocation9 [shape = 's32[1]{0}', space=sflag, size = 0x4, scoped, tag = 'scoped memory for gcn_forward_padded.1']
    #allocation10 [shape = 'u8[8192]{0}', space=vmem, size = 0x2000, scoped, tag = 'output window, operand 0, single buffered']
    %11 = vsyncpa [#allocation3], 0
    %12 = vsyncpa [#allocation6], 0
    %13 = vsyncpa [#allocation9], 0
    %14 = vsyncpa [#allocation4], 0
    // Predicated region
    $region2: #{gcn_forward_padded.1} parent=1 // pred_check
      _
    $region3: #{gcn_forward_padded.1} parent=1 // pred_check_branch
      %16 = sbr.rel (0) target = $region5
    $region4: #{gcn_forward_padded.1} parent=1 // pred_region
      %s18 = ssub.s32 128, 128
      %19 = vsyncadd [#allocation3], %s18
      %s20 = sshll.u32 [#allocation2], 4
      %s21 = int_to_ptr.vmem [resolvable:$true] %s20
      %26 = dma.hbm_to_vmem [thread:$0]  %s0, 128, %s21, [#allocation3], 64, 64, 4
    $region5: #{gcn_forward_padded.1} parent=1 // pred_fallthru
      _
    // Predicated region
    $region6: #{gcn_forward_padded.1} parent=1 // pred_check
      _
    $region7: #{gcn_forward_padded.1} parent=1 // pred_check_branch
      %28 = sbr.rel (0) target = $region9
    $region8: #{gcn_forward_padded.1} parent=1 // pred_region
      %s30 = ssub.s32 128, 128
      %31 = vsyncadd [#allocation6], %s30
      %s32 = sshll.u32 [#allocation5], 4
      %s33 = int_to_ptr.vmem [resolvable:$true] %s32
      %38 = dma.hbm_to_vmem [thread:$0]  %s1, 128, %s33, [#allocation6], 64, 64, 4
    $region9: #{gcn_forward_padded.1} parent=1 // pred_fallthru
      _
    // Predicated region
    $region10: #{gcn_forward_padded.1} parent=1 // pred_check
      _
    $region11: #{gcn_forward_padded.1} parent=1 // pred_check_branch
      %40 = sbr.rel (0) target = $region13
    $region12: #{gcn_forward_padded.1} parent=1 // pred_region
      %s42 = ssub.s32 1024, 1024
      %43 = vsyncadd [#allocation6], %s42
      %s44 = sshll.u32 [#allocation7], 4
      %s45 = int_to_ptr.vmem [resolvable:$true] %s44
      %50 = dma.hbm_to_vmem [thread:$0]  %s2, 1024, %s45, [#allocation6], 64, 64, 4
    $region13: #{gcn_forward_padded.1} parent=1 // pred_fallthru
      _
    // Predicated region
    $region14: #{gcn_forward_padded.1} parent=1 // pred_check
      _
    $region15: #{gcn_forward_padded.1} parent=1 // pred_check_branch
      %52 = sbr.rel (0) target = $region17
    $region16: #{gcn_forward_padded.1} parent=1 // pred_region
      _
    $region17: #{gcn_forward_padded.1} parent=1 // pred_fallthru
      _
    // Predicated region
    $region18: #{gcn_forward_padded.1} parent=1 // pred_check
      _
    $region19: #{gcn_forward_padded.1} parent=1 // pred_check_branch
      %54 = sbr.rel (0) target = $region21
    $region20: #{gcn_forward_padded.1} parent=1 // pred_region
      %s56 = ssub.s32 1024, 1024
      %57 = vsyncadd [#allocation9], %s56
      %s58 = sshll.u32 [#allocation8], 4
      %s59 = int_to_ptr.vmem [resolvable:$true] %s58
      %64 = dma.hbm_to_vmem [thread:$0]  %s4, 1024, %s59, [#allocation9], 64, 64, 4
    $region21: #{gcn_forward_padded.1} parent=1 // pred_fallthru
      _
    // Predicated region
    $region22: #{gcn_forward_padded.1} parent=1 // pred_check
      _
    $region23: #{gcn_forward_padded.1} parent=1 // pred_check_branch
      %66 = sbr.rel (0) target = $region25
    $region24: #{gcn_forward_padded.1} parent=1 // pred_region
      _
    $region25: #{gcn_forward_padded.1} parent=1 // pred_fallthru
      _
    // Predicated region
    $region26: #{gcn_forward_padded.1} parent=1 // pred_check
      _
    $region27: #{gcn_forward_padded.1} parent=1 // pred_check_branch
      %68 = sbr.rel (0) target = $region29
    $region28: #{gcn_forward_padded.1} parent=1 // pred_region
      %69 = dma.done [#allocation3], 128
    $region29: #{gcn_forward_padded.1} parent=1 // pred_fallthru
      _
    // Predicated region
    $region30: #{gcn_forward_padded.1} parent=1 // pred_check
      _
    $region31: #{gcn_forward_padded.1} parent=1 // pred_check_branch
      %71 = sbr.rel (0) target = $region33
    $region32: #{gcn_forward_padded.1} parent=1 // pred_region
      %72 = dma.done [#allocation6], 128
    $region33: #{gcn_forward_padded.1} parent=1 // pred_fallthru
      _
    // Predicated region
    $region34: #{gcn_forward_padded.1} parent=1 // pred_check
      _
    $region35: #{gcn_forward_padded.1} parent=1 // pred_check_branch
      %74 = sbr.rel (0) target = $region37
    $region36: #{gcn_forward_padded.1} parent=1 // pred_region
      %75 = dma.done [#allocation6], 1024
    $region37: #{gcn_forward_padded.1} parent=1 // pred_fallthru
      _
    // Predicated region
    $region38: #{gcn_forward_padded.1} parent=1 // pred_check
      _
    $region39: #{gcn_forward_padded.1} parent=1 // pred_check_branch
      %77 = sbr.rel (0) target = $region41
    $region40: #{gcn_forward_padded.1} parent=1 // pred_region
      %78 = dma.done [#allocation9], 1024
    $region41: #{gcn_forward_padded.1} parent=1 // pred_fallthru
      _
    %v80 = vld [vmem:[#allocation2] sm:$0xf]
    %v81 = vld [vmem:[#allocation2 + $0x4] sm:$0xf]
    %v82 = vld [vmem:[#allocation5] sm:$0xf]
    %v83 = vld [vmem:[#allocation5 + $0x4] sm:$0xf]
    %v86 = vunpack.c.l.b16 %v80
    %v87 = vunpack.c.l.b16 %v81
    %v88 = vpack.c.b16 %v87, %v86
    %v91 = vunpack.c.l.b16 %v82
    %v92 = vunpack.c.l.b16 %v83
    %v93 = vpack.c.b16 %v92, %v91
    %vm95 = vcmask 130048
    %v97 = vsel %vm95, %v88, 0
    %99 = vmatprep.subr.bf16.mxu0 0
    %100 = vmatpush1.bf16.msra.mxu0 %v93
    %101 = vmatprep.subr.bf16.mxu0 0
    %102 = vmatpush1.bf16.msra.mxu0 0
    %103 = vmatprep.subr.bf16.mxu0 0
    %104 = vmatpush1.bf16.msra.mxu0 0
    %105 = vmatprep.subr.bf16.mxu0 0
    %106 = vmatpush1.bf16.msra.mxu0 0
    %107 = vmatprep.subr.bf16.mxu0 0
    %108 = vmatpush1.bf16.msra.mxu0 0
    %109 = vmatprep.subr.bf16.mxu0 0
    %110 = vmatpush1.bf16.msra.mxu0 0
    %111 = vmatprep.subr.bf16.mxu0 0
    %112 = vmatpush1.bf16.msra.mxu0 0
    %113 = vmatprep.subr.bf16.mxu0 0
    %114 = vmatpush1.bf16.msra.mxu0 0
    %115 = vmatprep.subr.bf16.mxu0 0
    %116 = vmatpush1.bf16.msra.mxu0 0
    %117 = vmatprep.subr.bf16.mxu0 0
    %118 = vmatpush1.bf16.msra.mxu0 0
    %119 = vmatprep.subr.bf16.mxu0 0
    %120 = vmatpush1.bf16.msra.mxu0 0
    %121 = vmatprep.subr.bf16.mxu0 0
    %122 = vmatpush1.bf16.msra.mxu0 0
    %123 = vmatprep.subr.bf16.mxu0 0
    %124 = vmatpush1.bf16.msra.mxu0 0
    %125 = vmatprep.subr.bf16.mxu0 0
    %126 = vmatpush1.bf16.msra.mxu0 0
    %127 = vmatprep.subr.bf16.mxu0 0
    %128 = vmatpush1.bf16.msra.mxu0 0
    %129 = vmatprep.subr.bf16.mxu0 0
    %130 = vmatpush1.bf16.msra.mxu0 0
    %131 = vmatprep.mubr.bf16.mxu0 0
    %132 = vmatmul.mubr.bf16.gmra.mrb[0].mxu0 %v97
    %v133 = vpop.f32.mrb[0].mxu0
    %v134 = vadd.f32 0.0, %v133
    %v135 = vpop.f32.mrb[0].mxu0
    %v136 = vpop.f32.mrb[0].mxu0
    %v137 = vadd.f32 0.0, %v136
    %v138 = vpop.f32.mrb[0].mxu0
    %139 = vdwg.mxu0
    %v140 = vpack.c.bf16 %v137, %v134
    %v141 = vld [vmem:[#allocation7] sm:$0xf]
    %v142 = vld [vmem:[#allocation7 + $0x4] sm:$0xf]
    %v143 = vld [vmem:[#allocation7 + $0x8] sm:$0xf]
    %v144 = vld [vmem:[#allocation7 + $0xc] sm:$0xf]
    %v145 = vld [vmem:[#allocation7 + $0x10] sm:$0xf]
    %v146 = vld [vmem:[#allocation7 + $0x14] sm:$0xf]
    %v147 = vld [vmem:[#allocation7 + $0x18] sm:$0xf]
    %v148 = vld [vmem:[#allocation7 + $0x1c] sm:$0xf]
    %v149 = vld [vmem:[#allocation7 + $0x20] sm:$0xf]
    %v150 = vld [vmem:[#allocation7 + $0x24] sm:$0xf]
    %v151 = vld [vmem:[#allocation7 + $0x28] sm:$0xf]
    %v152 = vld [vmem:[#allocation7 + $0x2c] sm:$0xf]
    %v153 = vld [vmem:[#allocation7 + $0x30] sm:$0xf]
    %v154 = vld [vmem:[#allocation7 + $0x34] sm:$0xf]
    %v155 = vld [vmem:[#allocation7 + $0x38] sm:$0xf]
    %v156 = vld [vmem:[#allocation7 + $0x3c] sm:$0xf]
    %v157 = vld [vmem:[%s3] sm:$0x1]
    %v159 = vlaneseq
    %v160 = vshrl.u32 %v159, 7
    %v161 = vsub.s32 0, %v160
    %v162 = vrot.slane %v157, %v161
    %v180 = vunpack.c.l.b16 %v141
    %v181 = vunpack.c.l.b16 %v142
    %v182 = vunpack.c.l.b16 %v143
    %v183 = vunpack.c.l.b16 %v144
    %v184 = vunpack.c.l.b16 %v145
    %v185 = vunpack.c.l.b16 %v146
    %v186 = vunpack.c.l.b16 %v147
    %v187 = vunpack.c.l.b16 %v148
    %v188 = vunpack.c.l.b16 %v149
    %v189 = vunpack.c.l.b16 %v150
    %v190 = vunpack.c.l.b16 %v151
    %v191 = vunpack.c.l.b16 %v152
    %v192 = vunpack.c.l.b16 %v153
    %v193 = vunpack.c.l.b16 %v154
    %v194 = vunpack.c.l.b16 %v155
    %v195 = vunpack.c.l.b16 %v156
    %v196 = vpack.c.b16 %v181, %v180
    %v197 = vpack.c.b16 %v183, %v182
    %v198 = vpack.c.b16 %v185, %v184
    %v199 = vpack.c.b16 %v187, %v186
    %v200 = vpack.c.b16 %v189, %v188
    %v201 = vpack.c.b16 %v191, %v190
    %v202 = vpack.c.b16 %v193, %v192
    %v203 = vpack.c.b16 %v195, %v194
    %212 = vmatprep.subr.bf16.mxu0 0
    %213 = vmatpush1.bf16.msra.mxu0 %v196
    %214 = vmatprep.subr.bf16.mxu0 0
    %215 = vmatpush1.bf16.msra.mxu0 %v197
    %216 = vmatprep.subr.bf16.mxu0 0
    %217 = vmatpush1.bf16.msra.mxu0 %v198
    %218 = vmatprep.subr.bf16.mxu0 0
    %219 = vmatpush1.bf16.msra.mxu0 %v199
    %220 = vmatprep.subr.bf16.mxu0 0
    %221 = vmatpush1.bf16.msra.mxu0 %v200
    %222 = vmatprep.subr.bf16.mxu0 0
    %223 = vmatpush1.bf16.msra.mxu0 %v201
    %224 = vmatprep.subr.bf16.mxu0 0
    %225 = vmatpush1.bf16.msra.mxu0 %v202
    %226 = vmatprep.subr.bf16.mxu0 0
    %227 = vmatpush1.bf16.msra.mxu0 %v203
    %228 = vmatprep.subr.bf16.mxu0 0
    %229 = vmatpush1.bf16.msra.mxu0 0
    %230 = vmatprep.subr.bf16.mxu0 0
    %231 = vmatpush1.bf16.msra.mxu0 0
    %232 = vmatprep.subr.bf16.mxu0 0
    %233 = vmatpush1.bf16.msra.mxu0 0
    %234 = vmatprep.subr.bf16.mxu0 0
    %235 = vmatpush1.bf16.msra.mxu0 0
    %236 = vmatprep.subr.bf16.mxu0 0
    %237 = vmatpush1.bf16.msra.mxu0 0
    %238 = vmatprep.subr.bf16.mxu0 0
    %239 = vmatpush1.bf16.msra.mxu0 0
    %240 = vmatprep.subr.bf16.mxu0 0
    %241 = vmatpush1.bf16.msra.mxu0 0
    %242 = vmatprep.subr.bf16.mxu0 0
    %243 = vmatpush1.bf16.msra.mxu0 0
    %244 = vmatprep.mubr.bf16.mxu0 0
    %245 = vmatmul.mubr.bf16.gmra.mrb[0].mxu0 %v140
    %v246 = vpop.f32.mrb[0].mxu0
    %v247 = vadd.f32 %v162, %v246
    %v248 = vpop.f32.mrb[0].mxu0
    %v249 = vpop.f32.mrb[0].mxu0
    %v250 = vadd.f32 %v162, %v249
    %v251 = vpop.f32.mrb[0].mxu0
    %252 = vdwg.mxu0
    %v253 = vmax.f32 %v247, 0.0
    %v254 = vmax.f32 %v250, 0.0
    %v255 = vpack.c.bf16 %v254, %v253
    %v256 = vld [vmem:[#allocation8] sm:$0xf]
    %v257 = vld [vmem:[#allocation8 + $0x4] sm:$0xf]
    %v258 = vld [vmem:[#allocation8 + $0x8] sm:$0xf]
    %v259 = vld [vmem:[#allocation8 + $0xc] sm:$0xf]
    %v260 = vld [vmem:[#allocation8 + $0x10] sm:$0xf]
    %v261 = vld [vmem:[#allocation8 + $0x14] sm:$0xf]
    %v262 = vld [vmem:[#allocation8 + $0x18] sm:$0xf]
    %v263 = vld [vmem:[#allocation8 + $0x1c] sm:$0xf]
    %v264 = vld [vmem:[#allocation8 + $0x20] sm:$0xf]
    %v265 = vld [vmem:[#allocation8 + $0x24] sm:$0xf]
    %v266 = vld [vmem:[#allocation8 + $0x28] sm:$0xf]
    %v267 = vld [vmem:[#allocation8 + $0x2c] sm:$0xf]
    %v268 = vld [vmem:[#allocation8 + $0x30] sm:$0xf]
    %v269 = vld [vmem:[#allocation8 + $0x34] sm:$0xf]
    %v270 = vld [vmem:[#allocation8 + $0x38] sm:$0xf]
    %v271 = vld [vmem:[#allocation8 + $0x3c] sm:$0xf]
    %v288 = vunpack.c.l.b16 %v256
    %v289 = vunpack.c.l.b16 %v257
    %v290 = vunpack.c.l.b16 %v258
    %v291 = vunpack.c.l.b16 %v259
    %v292 = vunpack.c.l.b16 %v260
    %v293 = vunpack.c.l.b16 %v261
    %v294 = vunpack.c.l.b16 %v262
    %v295 = vunpack.c.l.b16 %v263
    %v296 = vunpack.c.l.b16 %v264
    %v297 = vunpack.c.l.b16 %v265
    %v298 = vunpack.c.l.b16 %v266
    %v299 = vunpack.c.l.b16 %v267
    %v300 = vunpack.c.l.b16 %v268
    %v301 = vunpack.c.l.b16 %v269
    %v302 = vunpack.c.l.b16 %v270
    %v303 = vunpack.c.l.b16 %v271
    %v304 = vpack.c.b16 %v289, %v288
    %v305 = vpack.c.b16 %v291, %v290
    %v306 = vpack.c.b16 %v293, %v292
    %v307 = vpack.c.b16 %v295, %v294
    %v308 = vpack.c.b16 %v297, %v296
    %v309 = vpack.c.b16 %v299, %v298
    %v310 = vpack.c.b16 %v301, %v300
    %v311 = vpack.c.b16 %v303, %v302
    %320 = vmatprep.subr.bf16.mxu0 0
    %321 = vmatpush1.bf16.msra.mxu0 %v304
    %322 = vmatprep.subr.bf16.mxu0 0
    %323 = vmatpush1.bf16.msra.mxu0 %v305
    %324 = vmatprep.subr.bf16.mxu0 0
    %325 = vmatpush1.bf16.msra.mxu0 %v306
    %326 = vmatprep.subr.bf16.mxu0 0
    %327 = vmatpush1.bf16.msra.mxu0 %v307
    %328 = vmatprep.subr.bf16.mxu0 0
    %329 = vmatpush1.bf16.msra.mxu0 %v308
    %330 = vmatprep.subr.bf16.mxu0 0
    %331 = vmatpush1.bf16.msra.mxu0 %v309
    %332 = vmatprep.subr.bf16.mxu0 0
    %333 = vmatpush1.bf16.msra.mxu0 %v310
    %334 = vmatprep.subr.bf16.mxu0 0
    %335 = vmatpush1.bf16.msra.mxu0 %v311
    %336 = vmatprep.subr.bf16.mxu0 0
    %337 = vmatpush1.bf16.msra.mxu0 0
    %338 = vmatprep.subr.bf16.mxu0 0
    %339 = vmatpush1.bf16.msra.mxu0 0
    %340 = vmatprep.subr.bf16.mxu0 0
    %341 = vmatpush1.bf16.msra.mxu0 0
    %342 = vmatprep.subr.bf16.mxu0 0
    %343 = vmatpush1.bf16.msra.mxu0 0
    %344 = vmatprep.subr.bf16.mxu0 0
    %345 = vmatpush1.bf16.msra.mxu0 0
    %346 = vmatprep.subr.bf16.mxu0 0
    %347 = vmatpush1.bf16.msra.mxu0 0
    %348 = vmatprep.subr.bf16.mxu0 0
    %349 = vmatpush1.bf16.msra.mxu0 0
    %350 = vmatprep.subr.bf16.mxu0 0
    %351 = vmatpush1.bf16.msra.mxu0 0
    %352 = vmatprep.mubr.bf16.mxu0 0
    %353 = vmatmul.mubr.bf16.gmra.mrb[0].mxu0 %v255
    %v354 = vpop.f32.mrb[0].mxu0
    %v355 = vadd.f32 0.0, %v354
    %v356 = vpop.f32.mrb[0].mxu0
    %v357 = vpop.f32.mrb[0].mxu0
    %v358 = vadd.f32 0.0, %v357
    %v359 = vpop.f32.mrb[0].mxu0
    %360 = vdwg.mxu0
    %v361 = vpack.c.bf16 %v358, %v355
    %v362 = vld [vmem:[%s5] sm:$0x1]
    %v364 = vlaneseq
    %v365 = vshrl.u32 %v364, 7
    %v366 = vsub.s32 0, %v365
    %v367 = vrot.slane %v362, %v366
    %369 = vmatprep.subr.bf16.mxu0 0
    %370 = vmatpush1.bf16.msra.mxu0 %v361
    %371 = vmatprep.subr.bf16.mxu0 0
    %372 = vmatpush1.bf16.msra.mxu0 0
    %373 = vmatprep.subr.bf16.mxu0 0
    %374 = vmatpush1.bf16.msra.mxu0 0
    %375 = vmatprep.subr.bf16.mxu0 0
    %376 = vmatpush1.bf16.msra.mxu0 0
    %377 = vmatprep.subr.bf16.mxu0 0
    %378 = vmatpush1.bf16.msra.mxu0 0
    %379 = vmatprep.subr.bf16.mxu0 0
    %380 = vmatpush1.bf16.msra.mxu0 0
    %381 = vmatprep.subr.bf16.mxu0 0
    %382 = vmatpush1.bf16.msra.mxu0 0
    %383 = vmatprep.subr.bf16.mxu0 0
    %384 = vmatpush1.bf16.msra.mxu0 0
    %385 = vmatprep.subr.bf16.mxu0 0
    %386 = vmatpush1.bf16.msra.mxu0 0
    %387 = vmatprep.subr.bf16.mxu0 0
    %388 = vmatpush1.bf16.msra.mxu0 0
    %389 = vmatprep.subr.bf16.mxu0 0
    %390 = vmatpush1.bf16.msra.mxu0 0
    %391 = vmatprep.subr.bf16.mxu0 0
    %392 = vmatpush1.bf16.msra.mxu0 0
    %393 = vmatprep.subr.bf16.mxu0 0
    %394 = vmatpush1.bf16.msra.mxu0 0
    %395 = vmatprep.subr.bf16.mxu0 0
    %396 = vmatpush1.bf16.msra.mxu0 0
    %397 = vmatprep.subr.bf16.mxu0 0
    %398 = vmatpush1.bf16.msra.mxu0 0
    %399 = vmatprep.subr.bf16.mxu0 0
    %400 = vmatpush1.bf16.msra.mxu0 0
    %401 = vmatprep.mubr.bf16.mxu0 0
    %402 = vmatmul.mubr.bf16.gmra.mrb[0].mxu0 %v97
    %v403 = vpop.f32.mrb[0].mxu0
    %v404 = vadd.f32 %v367, %v403
    %v405 = vpop.f32.mrb[0].mxu0
    %v406 = vpop.f32.mrb[0].mxu0
    %v407 = vadd.f32 %v367, %v406
    %v408 = vpop.f32.mrb[0].mxu0
    %409 = vdwg.mxu0
    %410 = vst [vmem:[#allocation10] sm:$0xff] %v404
    %411 = vst [vmem:[#allocation10 + $0x8] sm:$0xff] %v407
    // Predicated region
    $region42: #{gcn_forward_padded.1} parent=1 // pred_check
      _
    $region43: #{gcn_forward_padded.1} parent=1 // pred_check_branch
      %413 = sbr.rel (0) target = $region45
    $region44: #{gcn_forward_padded.1} parent=1 // pred_region
      %s415 = ssub.s32 256, 256
      %416 = vsyncadd [#allocation4], %s415
      %s417 = sshll.u32 [#allocation10], 4
      %s418 = int_to_ptr.vmem [resolvable:$true] %s417
      %423 = dma.vmem_to_hbm [thread:$0]  %s418, 256, %s6, [#allocation4], 128, 128, 8
    $region45: #{gcn_forward_padded.1} parent=1 // pred_fallthru
      _
    // Predicated region
    $region46: #{gcn_forward_padded.1} parent=1 // pred_check
      _
    $region47: #{gcn_forward_padded.1} parent=1 // pred_check_branch
      %425 = sbr.rel (0) target = $region49
    $region48: #{gcn_forward_padded.1} parent=1 // pred_region
      %426 = dma.done [#allocation4], 256
    $region49: #{gcn_forward_padded.1} parent=1 // pred_fallthru
      _
    %427 = vsyncpa [#allocation3], 1
    %428 = vsyncpa [#allocation6], 1
    %429 = vsyncpa [#allocation9], 1
    %430 = vsyncpa [#allocation4], 1

</llo_original>
